<compile_context>
chip_gen: v6e
topology: v6e:2x2x1
jax: 0.10.0
libtpu: 0.0.40
codegen_flags: <defaults>
</compile_context>

<pallas_src>
import functools

import jax
import jax.numpy as jnp
from jax.experimental import pallas as pl
from jax.experimental.pallas import tpu as pltpu

NEG_SLOPE = 0.01            # nn.LeakyReLU default negative_slope
MASK_VAL = -1000000000.0    # torch masking constant


def _leaky(x):
    return jnp.where(x >= 0.0, x, NEG_SLOPE * x)


def place_consume_kernel(x_ref, mask_ref, small_ref, shared_ref, out_ref):
    """One block of Bb batch elements per grid step.

    x_ref      : (Bb, T, 2K)  [place || h_time]  (h_time precomputed in wrapper)
    mask_ref   : (Bb, T, 1)   1.0 where the full (K+4)-wide marking row is zero
    small_ref  : (Bb, 2, K)   row 0 -> relu(C[t]); row 1 -> cons@w_b + pc_b1
    shared_ref : (3K+1, K)    rows 0:2K -> [w_a; w_c]; 2K:3K -> W2^T; 3K -> b2
    out_ref    : (Bb, T, K)   consumed_place_embedding block
    """
    Bb, T, K = out_ref.shape

    # Static ref slices (free): never materialize the whole weight pack.
    w_ac = shared_ref[0:2 * K, :]              # (2K, K)  stacked [w_a; w_c]
    w2 = shared_ref[2 * K:3 * K, :]            # (K, K)   Linear2 weight^T
    b2 = shared_ref[3 * K:3 * K + 1, :]        # (1, K)   Linear2 bias

    cons = small_ref[:, 0:1, :]                # (Bb, 1, K)  relu(C[t])
    b1_eff = small_ref[:, 1:2, :]              # (Bb, 1, K)  cons@w_b + pc_b1

    # Fused Linear1 over the whole block: (Bb*T, 2K) @ (2K, K).
    x = x_ref[...].reshape(Bb * T, 2 * K)
    b1_flat = jnp.broadcast_to(b1_eff, (Bb, T, K)).reshape(Bb * T, K)
    z = _leaky(jnp.dot(x, w_ac, preferred_element_type=jnp.float32) + b1_flat)
    # TODO(synk): nn.Dropout is omitted (eval-mode identity).
    z2 = jnp.dot(z, w2, preferred_element_type=jnp.float32) + b2
    z2 = z2.reshape(Bb, T, K)

    # Mask rows whose full marking row is all zero.
    z2 = jnp.where(mask_ref[...] > 0.5, MASK_VAL, z2)

    # Softmax over the trace-length axis (torch nn.Softmax(dim=1)).
    m = jnp.max(z2, axis=1, keepdims=True)
    e = jnp.exp(z2 - m)
    denom = jnp.sum(e, axis=1, keepdims=True)
    weights = e / denom                        # exact divide (tolerance-safe)

    out_ref[...] = (weights * cons).astype(out_ref.dtype)


def pack_params(params):
    """One-time packing of call-invariant weights (do this OUTSIDE forward)."""
    K = params["C"].shape[1]
    f32 = jnp.float32
    w1_t = params["pc_w1"].T.astype(f32)                       # (3K, K)
    w_a, w_b, w_c = w1_t[:K], w1_t[K:2 * K], w1_t[2 * K:]
    shared = jnp.concatenate(
        [w_a, w_c, params["pc_w2"].T.astype(f32),
         params["pc_b2"][None, :].astype(f32)], axis=0)        # (3K+1, K)
    return {
        "shared": shared,
        "w_b": w_b,                                            # (K, K)
        "C": params["C"].astype(f32),
        "time_w": params["time_w"].astype(f32),
        "time_b": params["time_b"].astype(f32),
        "pc_b1": params["pc_b1"].astype(f32),
    }


@functools.partial(jax.jit, static_argnames=("batch_block",))
def place_consume_forward(packed, marking_state, transition_seq, time_seq, *,
                          batch_block=None):
    B, T, Kp4 = marking_state.shape
    K = Kp4 - 4
    dtype = marking_state.dtype
    f32 = jnp.float32
    t_idx = transition_seq - 1                       # torch: transition_seq - 1

    place = marking_state[:, :, :K].astype(f32)      # (B, T, K)
    last4 = marking_state[:, :, K:].astype(f32)      # (B, T, 4)

    # ---- plain-JAX glue (fuses with the parameter gathers) ------------------
    cons = jnp.maximum(packed["C"][t_idx], 0.0)                        # (B, K)
    wt = packed["time_w"][t_idx]                                       # (B, 8, K)
    time_feature = jnp.concatenate(
        [jnp.broadcast_to(time_seq[:, None, :].astype(f32), (B, T, 4)), last4],
        axis=2)                                                        # (B, T, 8)
    h_time = _leaky(jnp.einsum("bti,bik->btk", time_feature, wt)
                    + packed["time_b"][t_idx][:, None, :])             # (B, T, K)
    x = jnp.concatenate([place, h_time], axis=-1)                      # (B, T, 2K)
    b1_eff = cons @ packed["w_b"] + packed["pc_b1"]                    # (B, K)
    small = jnp.stack([cons, b1_eff], axis=1)                          # (B, 2, K)
    maskf = jnp.all(marking_state == 0.0, axis=2)[..., None].astype(f32)  # (B,T,1)

    # ---- batch-block selection / padding ------------------------------------
    if batch_block is None:
        Bb = max(1, pl.cdiv(B, 2))          # grid >= 2 -> both v7x TensorCores
        per_b_bytes = (T * (3 * K + 1) + 2 * K) * 4
        Bb = min(Bb, max(1, (4 << 20) // per_b_bytes))  # << 16 MiB scoped VMEM
    else:
        Bb = int(batch_block)
    nblk = pl.cdiv(B, Bb)
    B_pad = nblk * Bb
    if B_pad != B:
        pad = ((0, B_pad - B), (0, 0), (0, 0))
        x = jnp.pad(x, pad)
        maskf = jnp.pad(maskf, pad)
        small = jnp.pad(small, pad)

    out = pl.pallas_call(
        place_consume_kernel,
        out_shape=jax.ShapeDtypeStruct((B_pad, T, K), dtype),
        grid=(nblk,),
        in_specs=[
            pl.BlockSpec((Bb, T, 2 * K), lambda b: (b, 0, 0)),   # place||h_time
            pl.BlockSpec((Bb, T, 1), lambda b: (b, 0, 0)),       # zero-row mask
            pl.BlockSpec((Bb, 2, K), lambda b: (b, 0, 0)),       # cons / b1_eff
            pl.BlockSpec((3 * K + 1, K), lambda b: (0, 0)),      # shared weights
        ],
        out_specs=pl.BlockSpec((Bb, T, K), lambda b: (b, 0, 0)),
        compiler_params=pltpu.CompilerParams(dimension_semantics=("parallel",)),
    )(x, maskf, small, packed["shared"])
    return out[:B]


def reference_forward(params, marking_state, transition_seq, time_seq):
    """Pure-JAX reference mirroring the PyTorch module (eval mode)."""
    t = transition_seq - 1
    B, T, Kp4 = marking_state.shape
    K = Kp4 - 4
    leaky = lambda v: jnp.where(v >= 0, v, 0.01 * v)

    cons = jnp.maximum(params["C"][t], 0.0)                            # (B, K)
    tf = jnp.concatenate(
        [jnp.broadcast_to(time_seq[:, None, :], (B, T, 4)),
         marking_state[:, :, K:]], axis=2)                             # (B, T, 8)
    time_emb = leaky(jnp.einsum("bti,bid->btd", tf, params["time_w"][t])
                     + params["time_b"][t][:, None, :])                # (B, T, K)
    concat = jnp.concatenate(
        [marking_state[:, :, :K],
         jnp.broadcast_to(cons[:, None, :], (B, T, K)),
         time_emb], axis=2)                                            # (B, T, 3K)
    z = leaky(concat @ params["pc_w1"].T + params["pc_b1"])
    z2 = z @ params["pc_w2"].T + params["pc_b2"]
    mask = jnp.all(marking_state == 0, axis=2)
    z2 = jnp.where(mask[..., None], -1000000000.0, z2)
    w = jax.nn.softmax(z2, axis=1)
    return w * cons[:, None, :]


if __name__ == "__main__":
    # Small shapes consistent with the module: B'=2, max_trace_len+1=9, K=32.
    B, T, K = 2, 9, 32
    TRANSITION_NUM = 6
    Kp4 = K + 4

    key = jax.random.PRNGKey(0)
    k0, k1, k2, k3, k4, k5, k6, k7, k8 = jax.random.split(key, 9)

    params = {
        "C": jax.random.normal(k0, (TRANSITION_NUM, K), jnp.float32),
        "time_w": jax.random.normal(k1, (TRANSITION_NUM, 8, K), jnp.float32),
        "time_b": jnp.zeros((TRANSITION_NUM, K), jnp.float32),
        "pc_w1": jax.random.uniform(k2, (K, 3 * K), jnp.float32, -0.1, 0.1),
        "pc_b1": jax.random.uniform(k3, (K,), jnp.float32, -0.1, 0.1),
        "pc_w2": jax.random.uniform(k4, (K, K), jnp.float32, -0.1, 0.1),
        "pc_b2": jax.random.uniform(k5, (K,), jnp.float32, -0.1, 0.1),
    }

    marking_state = jax.random.normal(k6, (B, T, Kp4), jnp.float32)
    # zero out trailing rows to exercise the all-zero-row mask
    row_ids = jnp.arange(T)[None, :, None]
    marking_state = jnp.where(row_ids >= T - 3, 0.0, marking_state)

    transition_seq = jax.random.randint(k7, (B,), 1, TRANSITION_NUM + 1)
    time_seq = jax.random.normal(k8, (B, 4), jnp.float32)

    packed = pack_params(params)            # one-time weight packing
    out = place_consume_forward(packed, marking_state, transition_seq, time_seq)
    out = jax.block_until_ready(out)

    ref = reference_forward(params, marking_state, transition_seq, time_seq)
    assert out.shape == (B, T, K), out.shape
    assert jnp.allclose(out, ref, atol=1e-4, rtol=1e-4), float(
        jnp.max(jnp.abs(out - ref)))

    print("KERNEL_OK")
</pallas_src>

<mosaic_0001>
module attributes {stable_mosaic.version = 11 : i64} {
  func.func @place_consume_kernel(%arg0: i32, %arg1: memref<1x9x64xf32, #tpu.memory_space<vmem>>, %arg2: memref<1x9x1xf32, #tpu.memory_space<vmem>>, %arg3: memref<1x2x32xf32, #tpu.memory_space<vmem>>, %arg4: memref<97x32xf32, #tpu.memory_space<vmem>>, %arg5: memref<1x9x32xf32, #tpu.memory_space<vmem>>) attributes {dimension_semantics = [#tpu.dimension_semantics<parallel>], iteration_bounds = array<i64: 2>, scalar_prefetch = 0 : i64, scratch_operands = 0 : i64, tpu.core_type = #tpu.core_type<tc>, window_params = [{transform_indices = @transform_0, window_bounds = array<i64: 1, 9, 64>}, {transform_indices = @transform_1, window_bounds = array<i64: 1, 9, 1>}, {transform_indices = @transform_2, window_bounds = array<i64: 1, 2, 32>}, {pipeline_mode = #tpu.pipeline_mode<synchronous>, transform_indices = @transform_3, window_bounds = array<i64: 97, 32>}, {transform_indices = @transform_4, window_bounds = array<i64: 1, 9, 32>}]} {
    %c0 = arith.constant 0 : index
    %c0_0 = arith.constant 0 : index
    %0 = vector.load %arg4[%c0, %c0_0] : memref<97x32xf32, #tpu.memory_space<vmem>>, vector<64x32xf32>
    %c64 = arith.constant 64 : index
    %c0_1 = arith.constant 0 : index
    %1 = vector.load %arg4[%c64, %c0_1] : memref<97x32xf32, #tpu.memory_space<vmem>>, vector<32x32xf32>
    %c96 = arith.constant 96 : index
    %c0_2 = arith.constant 0 : index
    %2 = vector.load %arg4[%c96, %c0_2] : memref<97x32xf32, #tpu.memory_space<vmem>>, vector<1x32xf32>
    %c0_3 = arith.constant 0 : index
    %c0_4 = arith.constant 0 : index
    %c0_5 = arith.constant 0 : index
    %3 = vector.load %arg3[%c0_3, %c0_4, %c0_5] : memref<1x2x32xf32, #tpu.memory_space<vmem>>, vector<1x1x32xf32>
    %c0_6 = arith.constant 0 : index
    %c1 = arith.constant 1 : index
    %c0_7 = arith.constant 0 : index
    %4 = vector.load %arg3[%c0_6, %c1, %c0_7] : memref<1x2x32xf32, #tpu.memory_space<vmem>>, vector<1x1x32xf32>
    %c0_8 = arith.constant 0 : index
    %c0_9 = arith.constant 0 : index
    %c0_10 = arith.constant 0 : index
    %5 = vector.load %arg1[%c0_8, %c0_9, %c0_10] : memref<1x9x64xf32, #tpu.memory_space<vmem>>, vector<1x9x64xf32>
    %6 = vector.shape_cast %5 : vector<1x9x64xf32> to vector<9x64xf32>
    %7 = vector.shape_cast %4 : vector<1x1x32xf32> to vector<1x1x32xf32>
    %8 = vector.broadcast %7 : vector<1x1x32xf32> to vector<1x9x32xf32>
    %9 = vector.shape_cast %8 : vector<1x9x32xf32> to vector<9x32xf32>
    %cst = arith.constant dense<0.000000e+00> : vector<9x32xf32>
    %10 = tpu.matmul %6, %0, %cst {dimension_numbers = #tpu.dot_dimension_numbers<[1], [0], [0], [1], [0, 0, 1, 1], [], []>} : vector<9x64xf32>, vector<64x32xf32>, vector<9x32xf32> -> vector<9x32xf32>
    %11 = arith.addf %10, %9 : vector<9x32xf32>
    %cst_11 = arith.constant 0.000000e+00 : f32
    %12 = vector.broadcast %cst_11 : f32 to vector<9x32xf32>
    %13 = arith.cmpf oge, %11, %12 : vector<9x32xf32>
    %cst_12 = arith.constant 0.00999999977 : f32
    %14 = vector.broadcast %cst_12 : f32 to vector<9x32xf32>
    %15 = arith.mulf %14, %11 : vector<9x32xf32>
    %16 = arith.select %13, %11, %15 : vector<9x32xi1>, vector<9x32xf32>
    %cst_13 = arith.constant dense<0.000000e+00> : vector<9x32xf32>
    %17 = tpu.matmul %16, %1, %cst_13 {dimension_numbers = #tpu.dot_dimension_numbers<[1], [0], [0], [1], [0, 0, 1, 1], [], []>} : vector<9x32xf32>, vector<32x32xf32>, vector<9x32xf32> -> vector<9x32xf32>
    %18 = vector.broadcast %2 : vector<1x32xf32> to vector<9x32xf32>
    %19 = arith.addf %17, %18 : vector<9x32xf32>
    %20 = vector.shape_cast %19 : vector<9x32xf32> to vector<1x9x32xf32>
    %c0_14 = arith.constant 0 : index
    %c0_15 = arith.constant 0 : index
    %c0_16 = arith.constant 0 : index
    %21 = vector.load %arg2[%c0_14, %c0_15, %c0_16] : memref<1x9x1xf32, #tpu.memory_space<vmem>>, vector<1x9x1xf32>
    %cst_17 = arith.constant 5.000000e-01 : f32
    %22 = vector.broadcast %cst_17 : f32 to vector<1x9x1xf32>
    %23 = arith.cmpf ogt, %21, %22 : vector<1x9x1xf32>
    %cst_18 = arith.constant -1.000000e+09 : f32
    %24 = vector.shape_cast %23 : vector<1x9x1xi1> to vector<1x9x1xi1>
    %25 = vector.broadcast %24 : vector<1x9x1xi1> to vector<1x9x32xi1>
    %26 = vector.broadcast %cst_18 : f32 to vector<1x9x32xf32>
    %27 = arith.select %25, %26, %20 : vector<1x9x32xi1>, vector<1x9x32xf32>
    %cst_19 = arith.constant dense<0xFF800000> : vector<1x32xf32>
    %28 = vector.multi_reduction <maximumf>, %27, %cst_19 [1] : vector<1x9x32xf32> to vector<1x32xf32>
    %29 = vector.shape_cast %28 : vector<1x32xf32> to vector<1x1x32xf32>
    %30 = vector.broadcast %29 : vector<1x1x32xf32> to vector<1x9x32xf32>
    %31 = arith.subf %27, %30 : vector<1x9x32xf32>
    %32 = math.exp %31 : vector<1x9x32xf32>
    %cst_20 = arith.constant dense<0.000000e+00> : vector<1x32xf32>
    %33 = vector.multi_reduction <add>, %32, %cst_20 [1] : vector<1x9x32xf32> to vector<1x32xf32>
    %34 = vector.shape_cast %33 : vector<1x32xf32> to vector<1x1x32xf32>
    %35 = vector.broadcast %34 : vector<1x1x32xf32> to vector<1x9x32xf32>
    %36 = arith.divf %32, %35 : vector<1x9x32xf32>
    %37 = vector.broadcast %3 : vector<1x1x32xf32> to vector<1x9x32xf32>
    %38 = arith.mulf %36, %37 : vector<1x9x32xf32>
    %c0_21 = arith.constant 0 : index
    %c0_22 = arith.constant 0 : index
    %c0_23 = arith.constant 0 : index
    %39 = vector.load %arg5[%c0_21, %c0_22, %c0_23] : memref<1x9x32xf32, #tpu.memory_space<vmem>>, vector<1x9x32xf32>
    tpu.vector_store %arg5[%c0_21, %c0_22, %c0_23], %38 {strides = array<i32>} : memref<1x9x32xf32, #tpu.memory_space<vmem>>, vector<1x9x32xf32>,
    return
  }
  func.func @transform_0(%arg0: i32) -> (i32, i32, i32) {
    %c0_i32 = arith.constant 0 : i32
    %c0_i32_0 = arith.constant 0 : i32
    %c0_i32_1 = arith.constant 0 : i32
    return %arg0, %c0_i32, %c0_i32_0 : i32, i32, i32
  }
  func.func @transform_1(%arg0: i32) -> (i32, i32, i32) {
    %c0_i32 = arith.constant 0 : i32
    %c0_i32_0 = arith.constant 0 : i32
    %c0_i32_1 = arith.constant 0 : i32
    return %arg0, %c0_i32, %c0_i32_0 : i32, i32, i32
  }
  func.func @transform_2(%arg0: i32) -> (i32, i32, i32) {
    %c0_i32 = arith.constant 0 : i32
    %c0_i32_0 = arith.constant 0 : i32
    %c0_i32_1 = arith.constant 0 : i32
    return %arg0, %c0_i32, %c0_i32_0 : i32, i32, i32
  }
  func.func @transform_3(%arg0: i32) -> (i32, i32) {
    %c0_i32 = arith.constant 0 : i32
    %c0_i32_0 = arith.constant 0 : i32
    %c0_i32_1 = arith.constant 0 : i32
    return %c0_i32, %c0_i32_0 : i32, i32
  }
  func.func @transform_4(%arg0: i32) -> (i32, i32, i32) {
    %c0_i32 = arith.constant 0 : i32
    %c0_i32_0 = arith.constant 0 : i32
    %c0_i32_1 = arith.constant 0 : i32
    return %arg0, %c0_i32, %c0_i32_0 : i32, i32, i32
  }
}

</mosaic_0001>

<llo_original>
// kernel: place_consume_forward.1
$region0: #{place_consume_forward.1}
  #allocation0 [shape = 'u32[]', space=smem, size = 0x4, offset = 0x4, fixed_abs, tag = 'smem constant byte address 0x4 - core index']
  #allocation1 [shape = 'u32[144,128]{1,0:T(1,128)}', space=vmem, size = 0x12000, scoped, tag = 'internal scratch']
  %s0 = inlined_call_operand.vmem [shape: f32[2,9,64], index: 0, kind: input, shape index: {}]
  %s1 = inlined_call_operand.vmem [shape: f32[2,9,1], index: 1, kind: input, shape index: {}]
  %s2 = inlined_call_operand.vmem [shape: f32[2,2,32], index: 2, kind: input, shape index: {}]
  %s3 = inlined_call_operand.vmem [shape: f32[97,32], index: 3, kind: input, shape index: {}]
  %s4 = inlined_call_operand.vmem [shape: f32[2,9,32], index: 4, kind: output, shape index: {}]
  %s5 = sld [smem:[#allocation0]]
  $region49: #{place_consume_forward.1} parent=0
    _
  %s7 = ssub.s32 1, %s5
  %s8 = scalar_select 0, %s7, %s5
  loop: start=0, step=1, limit=4
  $region2: #{place_consume_forward.1} parent=0 // loop_pre_header
    _
  $region3: #{place_consume_forward.1} parent=0 // loop_header
    %s10 = sphi 0, %s14
    %p11 = scmp.ge.s32.totalorder %s10, 4
    %s20 = sphi 0, %s22
    %s23 = sphi 0, %s20
    %s24 = sphi 0, %s23
    %s40 = sphi 0, %s24
    %s46 = sphi 0, %s48
    %s49 = sphi 0, %s46
    %s50 = sphi 0, %s49
    %s66 = sphi 0, %s50
    %s72 = sphi 0, %s74
    %s75 = sphi 0, %s72
    %s76 = sphi 0, %s75
    %s92 = sphi 0, %s76
    %s96 = sphi 0, %s96
    %s98 = sphi 0, %s96
    %s99 = sphi 0, %s98
    %s113 = sphi 0, %s99
    %s119 = sphi 0, %s121
    %s122 = sphi 0, %s119
    %s123 = sphi 0, %s122
    %s139 = sphi 0, %s123
  $region4: #{place_consume_forward.1} parent=0 // loop_header_branch
    %13 = sbr.rel (%p11) target = $region8
  $region5: #{place_consume_forward.1} parent=0 // loop_body
    %s15 = ssub.s32 %s10, 1
    %s16 = ssub.s32 %s10, 2
    %s17 = sadd.s32 %s10, 1
    %s18 = ssub.s32 %s10, %s17
    %p19 = scmp.eq.s32.totalorder %s18, 0
    %s21 = sadd.s32 %s20, 1
    %s22 = scalar_select %p19, %s20, %s21
    %p25 = pneg %p19
    %p26 = scmp.eq.s32.totalorder %s10, 1
    %p27 = por %p25, %p26
    %p28 = scmp.ne.s32.totalorder %s20, %s23
    %p29 = scmp.eq.s32.totalorder %s10, 0
    %p30 = por %p28, %p29
    %p31 = scmp.ne.s32.totalorder %s20, %s23
    %p32 = scmp.eq.s32.totalorder %s15, 1
    %p33 = por %p31, %p32
    %p34 = scmp.ne.s32.totalorder %s23, %s24
    %p35 = scmp.eq.s32.totalorder %s15, 0
    %p36 = por %p34, %p35
    %p37 = scmp.ne.s32.totalorder %s23, %s24
    %p38 = scmp.eq.s32.totalorder %s16, 1
    %p39 = por %p37, %p38
    %p41 = scmp.ne.s32.totalorder %s24, %s40
    %p42 = scmp.eq.s32.totalorder %s16, 0
    %p43 = por %p41, %p42
    %s44 = ssub.s32 %s10, %s17
    %p45 = scmp.eq.s32.totalorder %s44, 0
    %s47 = sadd.s32 %s46, 1
    %s48 = scalar_select %p45, %s46, %s47
    %p51 = pneg %p45
    %p52 = scmp.eq.s32.totalorder %s10, 1
    %p53 = por %p51, %p52
    %p54 = scmp.ne.s32.totalorder %s46, %s49
    %p55 = scmp.eq.s32.totalorder %s10, 0
    %p56 = por %p54, %p55
    %p57 = scmp.ne.s32.totalorder %s46, %s49
    %p58 = scmp.eq.s32.totalorder %s15, 1
    %p59 = por %p57, %p58
    %p60 = scmp.ne.s32.totalorder %s49, %s50
    %p61 = scmp.eq.s32.totalorder %s15, 0
    %p62 = por %p60, %p61
    %p63 = scmp.ne.s32.totalorder %s49, %s50
    %p64 = scmp.eq.s32.totalorder %s16, 1
    %p65 = por %p63, %p64
    %p67 = scmp.ne.s32.totalorder %s50, %s66
    %p68 = scmp.eq.s32.totalorder %s16, 0
    %p69 = por %p67, %p68
    %s70 = ssub.s32 %s10, %s17
    %p71 = scmp.eq.s32.totalorder %s70, 0
    %s73 = sadd.s32 %s72, 1
    %s74 = scalar_select %p71, %s72, %s73
    %p77 = pneg %p71
    %p78 = scmp.eq.s32.totalorder %s10, 1
    %p79 = por %p77, %p78
    %p80 = scmp.ne.s32.totalorder %s72, %s75
    %p81 = scmp.eq.s32.totalorder %s10, 0
    %p82 = por %p80, %p81
    %p83 = scmp.ne.s32.totalorder %s72, %s75
    %p84 = scmp.eq.s32.totalorder %s15, 1
    %p85 = por %p83, %p84
    %p86 = scmp.ne.s32.totalorder %s75, %s76
    %p87 = scmp.eq.s32.totalorder %s15, 0
    %p88 = por %p86, %p87
    %p89 = scmp.ne.s32.totalorder %s75, %s76
    %p90 = scmp.eq.s32.totalorder %s16, 1
    %p91 = por %p89, %p90
    %p93 = scmp.ne.s32.totalorder %s76, %s92
    %p94 = scmp.eq.s32.totalorder %s16, 0
    %p95 = por %p93, %p94
    %s97 = sadd.s32 %s96, 1
    %p100 = scmp.eq.s32.totalorder %s10, 1
    %p101 = scmp.ne.s32.totalorder %s96, %s98
    %p102 = scmp.eq.s32.totalorder %s10, 0
    %p103 = por %p101, %p102
    %p104 = scmp.ne.s32.totalorder %s96, %s98
    %p105 = scmp.eq.s32.totalorder %s15, 1
    %p106 = por %p104, %p105
    %p107 = scmp.ne.s32.totalorder %s98, %s99
    %p108 = scmp.eq.s32.totalorder %s15, 0
    %p109 = por %p107, %p108
    %p110 = scmp.ne.s32.totalorder %s98, %s99
    %p111 = scmp.eq.s32.totalorder %s16, 1
    %p112 = por %p110, %p111
    %p114 = scmp.ne.s32.totalorder %s99, %s113
    %p115 = scmp.eq.s32.totalorder %s16, 0
    %p116 = por %p114, %p115
    %s117 = ssub.s32 %s10, %s17
    %p118 = scmp.eq.s32.totalorder %s117, 0
    %s120 = sadd.s32 %s119, 1
    %s121 = scalar_select %p118, %s119, %s120
    %p124 = pneg %p118
    %p125 = scmp.eq.s32.totalorder %s10, 1
    %p126 = por %p124, %p125
    %p127 = scmp.ne.s32.totalorder %s119, %s122
    %p128 = scmp.eq.s32.totalorder %s10, 0
    %p129 = por %p127, %p128
    %p130 = scmp.ne.s32.totalorder %s119, %s122
    %p131 = scmp.eq.s32.totalorder %s15, 1
    %p132 = por %p130, %p131
    %p133 = scmp.ne.s32.totalorder %s122, %s123
    %p134 = scmp.eq.s32.totalorder %s15, 0
    %p135 = por %p133, %p134
    %p136 = scmp.ne.s32.totalorder %s122, %s123
    %p137 = scmp.eq.s32.totalorder %s16, 1
    %p138 = por %p136, %p137
    %p140 = scmp.ne.s32.totalorder %s123, %s139
    %p141 = scmp.eq.s32.totalorder %s16, 0
    %p142 = por %p140, %p141
    %p143 = scmp.le.s32.totalorder 1, %s10
    %p144 = scmp.lt.s32.totalorder %s10, 3
    %p145 = pnand %p143, %p144
    %p146 = pneg %p145
    // Predicated region
    $region9: #{place_consume_forward.1} parent=5 // pred_check
      _
    $region10: #{place_consume_forward.1} parent=5 // pred_check_branch
      %148 = sbr.rel (%p145) target = $region12
    $region11: #{place_consume_forward.1} parent=5 // pred_region
      %s149 = ssub.s32 %s10, 1
      // Predicated region
      $region13: #{place_consume_forward.1} parent=11 // pred_check
        %p150 = pneg %p109
      $region14: #{place_consume_forward.1} parent=11 // pred_check_branch
        %152 = sbr.rel (%p150) target = $region16
      $region15: #{place_consume_forward.1} parent=11 // pred_region
        _
      $region16: #{place_consume_forward.1} parent=11 // pred_fallthru
        _
    $region12: #{place_consume_forward.1} parent=5 // pred_fallthru
      _
    %p153 = scmp.lt.s32.totalorder %s10, 2
    // Predicated region
    $region17: #{place_consume_forward.1} parent=5 // pred_check
      %p154 = pneg %p153
    $region18: #{place_consume_forward.1} parent=5 // pred_check_branch
      %156 = sbr.rel (%p154) target = $region20
    $region19: #{place_consume_forward.1} parent=5 // pred_region
      // Predicated region
      $region21: #{place_consume_forward.1} parent=19 // pred_check
        %p157 = pneg %p30
      $region22: #{place_consume_forward.1} parent=19 // pred_check_branch
        %159 = sbr.rel (%p157) target = $region24
      $region23: #{place_consume_forward.1} parent=19 // pred_region
        %p160 = scmp.lt.s32.totalorder %s10, 1
        %s161 = scalar_select %p160, %s10, 1
        %s162 = smul.addr %s161, 2
        %s163 = smul.addr %s162, 8
        %s164 = scalar_lea.vmem %s0, %s163
      $region24: #{place_consume_forward.1} parent=19 // pred_fallthru
        _
      // Predicated region
      $region25: #{place_consume_forward.1} parent=19 // pred_check
        %p165 = pneg %p56
      $region26: #{place_consume_forward.1} parent=19 // pred_check_branch
        %167 = sbr.rel (%p165) target = $region28
      $region27: #{place_consume_forward.1} parent=19 // pred_region
        %p168 = scmp.lt.s32.totalorder %s10, 1
        %s169 = scalar_select %p168, %s10, 1
        %s170 = smul.addr %s169, 2
        %s171 = smul.addr %s170, 8
        %s172 = scalar_lea.vmem %s1, %s171
      $region28: #{place_consume_forward.1} parent=19 // pred_fallthru
        _
      // Predicated region
      $region29: #{place_consume_forward.1} parent=19 // pred_check
        %p173 = pneg %p82
      $region30: #{place_consume_forward.1} parent=19 // pred_check_branch
        %175 = sbr.rel (%p173) target = $region32
      $region31: #{place_consume_forward.1} parent=19 // pred_region
        %p176 = scmp.lt.s32.totalorder %s10, 1
        %s177 = scalar_select %p176, %s10, 1
        %s178 = smul.addr %s177, 2
        %s179 = scalar_lea.vmem %s2, %s178
      $region32: #{place_consume_forward.1} parent=19 // pred_fallthru
        _
    $region20: #{place_consume_forward.1} parent=5 // pred_fallthru
      _
    %p180 = scmp.le.s32.totalorder 1, %s10
    %p181 = scmp.lt.s32.totalorder %s10, 3
    %p182 = pnand %p180, %p181
    %p183 = pneg %p182
    // Predicated region
    $region33: #{place_consume_forward.1} parent=5 // pred_check
      _
    $region34: #{place_consume_forward.1} parent=5 // pred_check_branch
      %185 = sbr.rel (%p182) target = $region36
    $region35: #{place_consume_forward.1} parent=5 // pred_region
      %s186 = ssub.s32 %s10, 1
      %p187 = scmp.lt.s32.totalorder %s15, 1
      %s188 = scalar_select %p187, %s15, 1
      %s189 = smul.addr %s188, 2
      %s190 = smul.addr %s189, 8
      %s191 = scalar_lea.vmem %s0, %s190
      %p192 = pneg %p36
      %p193 = pneg %p33
      %p194 = scmp.lt.s32.totalorder %s15, 1
      %s195 = scalar_select %p194, %s15, 1
      %s196 = smul.addr %s195, 2
      %s197 = smul.addr %s196, 8
      %s198 = scalar_lea.vmem %s1, %s197
      %p199 = pneg %p62
      %p200 = pneg %p59
      %p201 = scmp.lt.s32.totalorder %s15, 1
      %s202 = scalar_select %p201, %s15, 1
      %s203 = smul.addr %s202, 2
      %s204 = scalar_lea.vmem %s2, %s203
      %p205 = pneg %p88
      %p206 = pneg %p85
      %p207 = pneg %p109
      %p208 = pneg %p106
      %p209 = pneg %p135
      %p210 = pneg %p132
      %p211 = scmp.lt.s32.totalorder %s15, 1
      %s212 = scalar_select %p211, %s15, 1
      %s213 = smul.addr %s212, 2
      %s214 = smul.addr %s213, 8
      %s215 = scalar_lea.vmem %s4, %s214
      %p216 = scmp.lt.s32.totalorder %s15, 1
      %s217 = scalar_select %p216, %s15, 1
      %s218 = smul.addr %s217, 2
      %s219 = smul.addr %s218, 8
      %s220 = scalar_lea.vmem %s0, %s219
      %p221 = scmp.lt.s32.totalorder %s15, 1
      %s222 = scalar_select %p221, %s15, 1
      %s223 = smul.addr %s222, 2
      %s224 = smul.addr %s223, 8
      %s225 = scalar_lea.vmem %s1, %s224
      %p226 = scmp.lt.s32.totalorder %s15, 1
      %s227 = scalar_select %p226, %s15, 1
      %s228 = smul.addr %s227, 2
      %s229 = scalar_lea.vmem %s2, %s228
      %p230 = scmp.lt.s32.totalorder %s15, 1
      %s231 = scalar_select %p230, %s15, 1
      %s232 = smul.addr %s231, 2
      %s233 = smul.addr %s232, 8
      %s234 = scalar_lea.vmem %s4, %s233
      %v235 = vld [vmem:[%s3] sm:$0xff]
      %v236 = vld [vmem:[%s3 + $0x8] sm:$0xff]
      %v237 = vld [vmem:[%s3 + $0x10] sm:$0xff]
      %v238 = vld [vmem:[%s3 + $0x18] sm:$0xff]
      %v239 = vld [vmem:[%s3 + $0x20] sm:$0xff]
      %v240 = vld [vmem:[%s3 + $0x28] sm:$0xff]
      %v241 = vld [vmem:[%s3 + $0x30] sm:$0xff]
      %v242 = vld [vmem:[%s3 + $0x38] sm:$0xff]
      %v243 = vld [vmem:[%s3 + $0x40] sm:$0xff]
      %v244 = vld [vmem:[%s3 + $0x48] sm:$0xff]
      %v245 = vld [vmem:[%s3 + $0x50] sm:$0xff]
      %v246 = vld [vmem:[%s3 + $0x58] sm:$0xff]
      %v247 = vld [vmem:[%s3 + $0x60] sm:$0x1]
      %v248 = vld [vmem:[%s229] sm:$0x1]
      %v249 = vld [vmem:[%s229 + $0x1] sm:$0x1]
      %v250 = vld [vmem:[%s220] sm:$0xff]
      %v251 = vld [vmem:[%s220 + $0x8] sm:$0x1]
      %v252 = vlaneseq
      %v253 = vshrl.u32 %v252, 7
      %v254 = vsub.s32 0, %v253
      %v255 = vrot.slane %v249, %v254
      %vm256 = vcmask 523264
      %v258 = vsel %vm256, %v250, 0
      %v261 = vsel %vm256, %v251, 0
      %263 = vmatprep.subr.mxu0 0.0
      %264 = vmatpush1.msra.mxu0 0.0
      %265 = vmatprep.subr.mxu0 0.0
      %266 = vmatpush1.msra.mxu0 0.0
      %267 = vmatprep.subr.mxu0 0.0
      %268 = vmatpush1.msra.mxu0 0.0
      %269 = vmatprep.subr.mxu0 0.0
      %270 = vmatpush1.msra.mxu0 0.0
      %271 = vmatprep.subr.mxu0 0.0
      %272 = vmatpush1.msra.mxu0 0.0
      %273 = vmatprep.subr.mxu0 0.0
      %274 = vmatpush1.msra.mxu0 0.0
      %275 = vmatprep.subr.mxu0 0.0
      %276 = vmatpush1.msra.mxu0 0.0
      %277 = vmatprep.subr.mxu0 0.0
      %278 = vmatpush1.msra.mxu0 0.0
      %279 = vmatprep.subr.mxu0 0.0
      %280 = vmatpush1.msra.mxu0 %v242
      %281 = vmatprep.subr.mxu0 0.0
      %282 = vmatpush1.msra.mxu0 %v241
      %283 = vmatprep.subr.mxu0 0.0
      %284 = vmatpush1.msra.mxu0 %v240
      %285 = vmatprep.subr.mxu0 0.0
      %286 = vmatpush1.msra.mxu0 %v239
      %287 = vmatprep.subr.mxu0 0.0
      %288 = vmatpush1.msra.mxu0 %v238
      %289 = vmatprep.subr.mxu0 0.0
      %290 = vmatpush1.msra.mxu0 %v237
      %291 = vmatprep.subr.mxu0 0.0
      %292 = vmatpush1.msra.mxu0 %v236
      %293 = vmatprep.subr.mxu0 0.0
      %294 = vmatpush1.msra.mxu0 %v235
      %295 = vmatprep.subr.mxu0 0.0
      %296 = vmatpush2.msra.mxu0 0.0
      %297 = vmatprep.subr.mxu0 0.0
      %298 = vmatpush2.msra.mxu0 0.0
      %299 = vmatprep.subr.mxu0 0.0
      %300 = vmatpush2.msra.mxu0 0.0
      %301 = vmatprep.subr.mxu0 0.0
      %302 = vmatpush2.msra.mxu0 0.0
      %303 = vmatprep.subr.mxu0 0.0
      %304 = vmatpush2.msra.mxu0 0.0
      %305 = vmatprep.subr.mxu0 0.0
      %306 = vmatpush2.msra.mxu0 0.0
      %307 = vmatprep.subr.mxu0 0.0
      %308 = vmatpush2.msra.mxu0 0.0
      %309 = vmatprep.subr.mxu0 0.0
      %310 = vmatpush2.msra.mxu0 0.0
      %311 = vmatprep.subr.mxu0 0.0
      %312 = vmatpush2.msra.mxu0 0.0
      %313 = vmatprep.subr.mxu0 0.0
      %314 = vmatpush2.msra.mxu0 0.0
      %315 = vmatprep.subr.mxu0 0.0
      %316 = vmatpush2.msra.mxu0 0.0
      %317 = vmatprep.subr.mxu0 0.0
      %318 = vmatpush2.msra.mxu0 0.0
      %319 = vmatprep.subr.mxu0 0.0
      %320 = vmatpush2.msra.mxu0 0.0
      %321 = vmatprep.subr.mxu0 0.0
      %322 = vmatpush2.msra.mxu0 0.0
      %323 = vmatprep.subr.mxu0 0.0
      %324 = vmatpush2.msra.mxu0 0.0
      %325 = vmatprep.subr.mxu0 0.0
      %326 = vmatpush2.msra.mxu0 0.0
      %327 = vmatprep.mubr.f32.mxu0 0.0
      %328 = vmatmul.mubr.f32.gmra.mxu0 %v258
      %v329 = vpop.f32.mrf.mxu0
      %v330 = vadd.f32 %v255, %v329
      %v331 = vpop.f32.mrf.mxu0
      %332 = vmatprep.mubr.f32.mxu0 0.0
      %333 = vmatmul.mubr.f32.gmra.mxu0 %v261
      %v334 = vpop.f32.mrf.mxu0
      %v335 = vadd.f32 %v255, %v334
      %v336 = vpop.f32.mrf.mxu0
      %337 = vdwg.mxu0
      %vm338 = vcmp.ge.f32.partialorder %v330, 0.0
      %vm339 = vcmp.ge.f32.partialorder %v335, 0.0
      %v340 = vmul.f32 %v330, 0.01
      %v341 = vmul.f32 %v335, 0.01
      %v342 = vsel %vm338, %v330, %v340
      %v343 = vsel %vm339, %v335, %v341
      %v344 = vlaneseq
      %v345 = vshrl.u32 %v344, 7
      %v346 = vsub.s32 0, %v345
      %v347 = vrot.slane %v247, %v346
      %vm348 = vcmask 261120
      %v350 = vsel %vm348, %v342, 0
      %v353 = vsel %vm348, %v343, 0
      %355 = vmatprep.subr.mxu0 0.0
      %356 = vmatpush1.msra.mxu0 0.0
      %357 = vmatprep.subr.mxu0 0.0
      %358 = vmatpush1.msra.mxu0 0.0
      %359 = vmatprep.subr.mxu0 0.0
      %360 = vmatpush1.msra.mxu0 0.0
      %361 = vmatprep.subr.mxu0 0.0
      %362 = vmatpush1.msra.mxu0 0.0
      %363 = vmatprep.subr.mxu0 0.0
      %364 = vmatpush1.msra.mxu0 0.0
      %365 = vmatprep.subr.mxu0 0.0
      %366 = vmatpush1.msra.mxu0 0.0
      %367 = vmatprep.subr.mxu0 0.0
      %368 = vmatpush1.msra.mxu0 0.0
      %369 = vmatprep.subr.mxu0 0.0
      %370 = vmatpush1.msra.mxu0 0.0
      %371 = vmatprep.subr.mxu0 0.0
      %372 = vmatpush1.msra.mxu0 0.0
      %373 = vmatprep.subr.mxu0 0.0
      %374 = vmatpush1.msra.mxu0 0.0
      %375 = vmatprep.subr.mxu0 0.0
      %376 = vmatpush1.msra.mxu0 0.0
      %377 = vmatprep.subr.mxu0 0.0
      %378 = vmatpush1.msra.mxu0 0.0
      %379 = vmatprep.subr.mxu0 0.0
      %380 = vmatpush1.msra.mxu0 %v246
      %381 = vmatprep.subr.mxu0 0.0
      %382 = vmatpush1.msra.mxu0 %v245
      %383 = vmatprep.subr.mxu0 0.0
      %384 = vmatpush1.msra.mxu0 %v244
      %385 = vmatprep.subr.mxu0 0.0
      %386 = vmatpush1.msra.mxu0 %v243
      %387 = vmatprep.subr.mxu0 0.0
      %388 = vmatpush2.msra.mxu0 0.0
      %389 = vmatprep.subr.mxu0 0.0
      %390 = vmatpush2.msra.mxu0 0.0
      %391 = vmatprep.subr.mxu0 0.0
      %392 = vmatpush2.msra.mxu0 0.0
      %393 = vmatprep.subr.mxu0 0.0
      %394 = vmatpush2.msra.mxu0 0.0
      %395 = vmatprep.subr.mxu0 0.0
      %396 = vmatpush2.msra.mxu0 0.0
      %397 = vmatprep.subr.mxu0 0.0
      %398 = vmatpush2.msra.mxu0 0.0
      %399 = vmatprep.subr.mxu0 0.0
      %400 = vmatpush2.msra.mxu0 0.0
      %401 = vmatprep.subr.mxu0 0.0
      %402 = vmatpush2.msra.mxu0 0.0
      %403 = vmatprep.subr.mxu0 0.0
      %404 = vmatpush2.msra.mxu0 0.0
      %405 = vmatprep.subr.mxu0 0.0
      %406 = vmatpush2.msra.mxu0 0.0
      %407 = vmatprep.subr.mxu0 0.0
      %408 = vmatpush2.msra.mxu0 0.0
      %409 = vmatprep.subr.mxu0 0.0
      %410 = vmatpush2.msra.mxu0 0.0
      %411 = vmatprep.subr.mxu0 0.0
      %412 = vmatpush2.msra.mxu0 0.0
      %413 = vmatprep.subr.mxu0 0.0
      %414 = vmatpush2.msra.mxu0 0.0
      %415 = vmatprep.subr.mxu0 0.0
      %416 = vmatpush2.msra.mxu0 0.0
      %417 = vmatprep.subr.mxu0 0.0
      %418 = vmatpush2.msra.mxu0 0.0
      %419 = vmatprep.mubr.f32.mxu0 0.0
      %420 = vmatmul.mubr.f32.gmra.mxu0 %v350
      %v421 = vpop.f32.mrf.mxu0
      %v422 = vadd.f32 %v347, %v421
      %v423 = vpop.f32.mrf.mxu0
      %424 = vmatprep.mubr.f32.mxu0 0.0
      %425 = vmatmul.mubr.f32.gmra.mxu0 %v353
      %v426 = vpop.f32.mrf.mxu0
      %v427 = vadd.f32 %v347, %v426
      %v428 = vpop.f32.mrf.mxu0
      %429 = vdwg.mxu0
      %v430 = vld [vmem:[%s225] sm:$0xff]
      %v431 = vld [vmem:[%s225 + $0x8] sm:$0x1]
      %vm432 = vcmp.gt.f32.partialorder %v430, 0.5
      %vm433 = vcmp.gt.f32.partialorder %v431, 0.5
      %v434 = vsel %vm432, 1, 0
      %v435 = vsel %vm433, 1, 0
      %436 = vset.pattern.permute.xlu0 0
      %437 = vperm.xlu0 %436, %v434
      %v438 = vpop.permute.xlu0 %437
      %439 = vset.pattern.permute.xlu0 0
      %440 = vperm.xlu0 %439, %v435
      %v441 = vpop.permute.xlu0 %440
      %vm442 = vcmp.eq.s32.totalorder %v438, 1
      %vm443 = vcmp.eq.s32.totalorder %v441, 1
      %v444 = vsel %vm442, -1e+09, %v422
      %v445 = vsel %vm443, -1e+09, %v427
      %v446 = vsel %vm348, %v444, -inf
      %vm447 = vcmask 253952
      %v448 = vsel %vm447, %v445, -inf
      %v449 = vmax.f32 %v446, %v448
      %v450 = vrot.slane %v449, 4
      %v451 = vmax.f32 %v449, %v450
      %v452 = vrot.slane %v451, 2
      %v453 = vmax.f32 %v451, %v452
      %v454 = vrot.slane %v453, 1
      %v455 = vmax.f32 %v453, %v454
      %v456 = vsub.f32 %v444, %v455
      %v457 = vsub.f32 %v445, %v455
      %v458 = vmul.f32 %v456, 1.442695
      %v459 = vpow.pop %v458
      %v460 = vmul.f32 %v457, 1.442695
      %v461 = vpow.pop %v460
      %v462 = vsel %vm348, %v459, 0.0
      %v463 = vsel %vm447, %v461, 0.0
      %v464 = vadd.f32 %v462, %v463
      %v465 = vrot.slane %v464, 4
      %v466 = vadd.f32 %v464, %v465
      %v467 = vrot.slane %v466, 2
      %v468 = vadd.f32 %v466, %v467
      %v469 = vrot.slane %v468, 1
      %v470 = vadd.f32 %v468, %v469
      %v471 = vrcp.pop %v470
      %v472 = vmul.f32 %v459, %v471
      %v473 = vmul.f32 %v461, %v471
      %v474 = vlaneseq
      %v475 = vshrl.u32 %v474, 7
      %v476 = vsub.s32 0, %v475
      %v477 = vrot.slane %v248, %v476
      %v478 = vmul.f32 %v472, %v477
      %v479 = vmul.f32 %v473, %v477
      %480 = vst.msk [vmem:[%s234] sm:$0xff] %vm348, %v478
      %481 = vst.msk [vmem:[%s234 + $0x8] sm:$0x1] %vm447, %v479
      %p482 = scmp.lt.s32.totalorder %s15, 1
      %s483 = scalar_select %p482, %s15, 1
      %s484 = smul.addr %s483, 2
      %s485 = smul.addr %s484, 8
      %s486 = scalar_lea.vmem %s4, %s485
      // Predicated region
      $region37: #{place_consume_forward.1} parent=35 // pred_check
        %p487 = pneg %p132
      $region38: #{place_consume_forward.1} parent=35 // pred_check_branch
        %489 = sbr.rel (%p487) target = $region40
      $region39: #{place_consume_forward.1} parent=35 // pred_region
        _
      $region40: #{place_consume_forward.1} parent=35 // pred_fallthru
        _
    $region36: #{place_consume_forward.1} parent=5 // pred_fallthru
      _
    %p490 = scmp.le.s32.totalorder 2, %s10
    // Predicated region
    $region41: #{place_consume_forward.1} parent=5 // pred_check
      %p491 = pneg %p490
    $region42: #{place_consume_forward.1} parent=5 // pred_check_branch
      %493 = sbr.rel (%p491) target = $region44
    $region43: #{place_consume_forward.1} parent=5 // pred_region
      %s494 = ssub.s32 %s10, 2
      // Predicated region
      $region45: #{place_consume_forward.1} parent=43 // pred_check
        %p495 = pneg %p138
      $region46: #{place_consume_forward.1} parent=43 // pred_check_branch
        %497 = sbr.rel (%p495) target = $region48
      $region47: #{place_consume_forward.1} parent=43 // pred_region
        %p498 = scmp.lt.s32.totalorder %s16, 1
        %s499 = scalar_select %p498, %s16, 1
        %s500 = smul.addr %s499, 2
        %s501 = smul.addr %s500, 8
        %s502 = scalar_lea.vmem %s4, %s501
      $region48: #{place_consume_forward.1} parent=43 // pred_fallthru
        _
    $region44: #{place_consume_forward.1} parent=5 // pred_fallthru
      _
  $region6: #{place_consume_forward.1} parent=0 // loop_footer
    %s14 = sadd.s32 1, %s10
  $region7: #{place_consume_forward.1} parent=0 // loop_footer_branch
    %9 = sbr.rel target = $region3
  $region8: #{place_consume_forward.1} parent=0 // loop_exit
    _

</llo_original>
